<compile_context>
chip_gen: v5e
topology: v5e:2x2
jax: 0.10.0
libtpu: 0.0.40
codegen_flags: <defaults>
</compile_context>

<pallas_src>
import jax
import jax.numpy as jnp
from jax.experimental import pallas as pl
from jax.experimental.pallas import tpu as pltpu


def gravity_kernel(mass_ref, pos_ref, sample_ref, out_ref):
    """mass_ref: (N,1) VMEM, pos_ref: (N,D) VMEM, sample_ref/out_ref: (D,B) VMEM."""
    s = sample_ref[...]                      # (D, B)   B on lanes
    p = pos_ref[...]                         # (N, D)
    m = mass_ref[...]                        # (N, 1)
    D = s.shape[0]

    # Per-coordinate diffs, vectorized over particles: diff_d[n, b] = s[d, b] - p[n, d]
    diffs = [s[d:d + 1, :] - p[:, d:d + 1] for d in range(D)]        # each (N, B)

    # |diff|^2 as unrolled elementwise adds (no cross-lane reduce; D is tiny & static).
    dist2 = diffs[0] * diffs[0]
    for d in range(1, D):
        dist2 = dist2 + diffs[d] * diffs[d]                          # (N, B)

    # 1/dist^3 via rsqrt + multiplies (one EUP op, rest VPU).
    inv = jax.lax.rsqrt(dist2)                                       # (N, B)
    w = (-10.0 * m) * (inv * inv * inv)                              # (N, B)

    # force_d = sum_n w[n, :] * diff_d[n, :]  -> small sublane reduction over N.
    for d in range(D):
        out_ref[d:d + 1, :] = jnp.sum(w * diffs[d], axis=0, keepdims=True)


def gravity_forward(sample_pos, masses, positions):
    """sample_pos: (B, D) f32, masses: (N,) f32, positions: (N, D) f32 -> (B, D) f32."""
    B, D = sample_pos.shape
    N = masses.shape[0]

    sample_t = jnp.transpose(sample_pos)          # (D, B): batch on the lane axis
    masses2d = masses.reshape(N, 1)               # (N, 1): particles on sublanes

    out_t = pl.pallas_call(
        gravity_kernel,
        out_shape=jax.ShapeDtypeStruct((D, B), jnp.float32),
        grid=(1,),
        in_specs=[
            pl.BlockSpec((N, 1), lambda i: (0, 0)),     # masses
            pl.BlockSpec((N, D), lambda i: (0, 0)),     # particle positions
            pl.BlockSpec((D, B), lambda i: (0, 0)),     # transposed sample positions
        ],
        out_specs=pl.BlockSpec((D, B), lambda i: (0, 0)),
        compiler_params=pltpu.CompilerParams(
            dimension_semantics=("arbitrary",)),
    )(masses2d, positions, sample_t)

    return jnp.transpose(out_t)                   # back to (B, D)


def gravity_ref(sample_pos, masses, positions):
    """Pure-JAX reference mirroring Model.forward + analytical_force."""
    diff = sample_pos[:, None, :] - positions[None, :, :]            # (B, N, D)
    dist = jnp.sqrt(jnp.sum(diff * diff, axis=-1, keepdims=True))    # (B, N, 1)
    force = -10.0 * masses[None, :, None] * diff / (dist ** 3)       # (B, N, D)
    return jnp.sum(force, axis=1)                                    # (B, D)


if __name__ == "__main__":
    # Deterministic "module parameters" (MassOptimizerModel __init__ arguments):
    # N = 4 particles in D = 3 dims.
    masses = jnp.array([1.0, 2.0, 3.0, 4.0], dtype=jnp.float32)
    positions = jnp.array(
        [[1.0, 1.0, 0.0],
         [-1.0, 1.0, 0.5],
         [1.0, -1.0, -0.5],
         [-1.0, -1.0, 1.0]], dtype=jnp.float32)

    # Deterministic sample positions: B = 8 query points in 3D.
    key = jax.random.PRNGKey(0)
    sample_pos = (3.0 * jax.random.normal(key, (8, 3), dtype=jnp.float32)
                  + jnp.array([0.3, -0.2, 0.1], dtype=jnp.float32))

    out = gravity_forward(sample_pos, masses, positions)
    out = jax.block_until_ready(out)

    ref = gravity_ref(sample_pos, masses, positions)
    assert out.shape == ref.shape and out.dtype == jnp.float32
    assert jnp.allclose(out, ref, rtol=1e-4, atol=1e-4), (out, ref)

    print("KERNEL_OK")
</pallas_src>

<mosaic_0001>
module attributes {stable_mosaic.version = 11 : i64} {
  func.func @gravity_kernel(%arg0: i32, %arg1: memref<4x1xf32, #tpu.memory_space<vmem>>, %arg2: memref<4x3xf32, #tpu.memory_space<vmem>>, %arg3: memref<3x8xf32, #tpu.memory_space<vmem>>, %arg4: memref<3x8xf32, #tpu.memory_space<vmem>>) attributes {dimension_semantics = [#tpu.dimension_semantics<arbitrary>], iteration_bounds = array<i64: 1>, scalar_prefetch = 0 : i64, scratch_operands = 0 : i64, tpu.core_type = #tpu.core_type<tc>, window_params = [{pipeline_mode = #tpu.pipeline_mode<synchronous>, transform_indices = @transform_0, window_bounds = array<i64: 4, 1>}, {pipeline_mode = #tpu.pipeline_mode<synchronous>, transform_indices = @transform_1, window_bounds = array<i64: 4, 3>}, {pipeline_mode = #tpu.pipeline_mode<synchronous>, transform_indices = @transform_2, window_bounds = array<i64: 3, 8>}, {pipeline_mode = #tpu.pipeline_mode<synchronous>, transform_indices = @transform_3, window_bounds = array<i64: 3, 8>}]} {
    %c0 = arith.constant 0 : index
    %c0_0 = arith.constant 0 : index
    %0 = vector.load %arg3[%c0, %c0_0] : memref<3x8xf32, #tpu.memory_space<vmem>>, vector<3x8xf32>
    %c0_1 = arith.constant 0 : index
    %c0_2 = arith.constant 0 : index
    %1 = vector.load %arg2[%c0_1, %c0_2] : memref<4x3xf32, #tpu.memory_space<vmem>>, vector<4x3xf32>
    %c0_3 = arith.constant 0 : index
    %c0_4 = arith.constant 0 : index
    %2 = vector.load %arg1[%c0_3, %c0_4] : memref<4x1xf32, #tpu.memory_space<vmem>>, vector<4x1xf32>
    %3 = vector.extract_strided_slice %0 {offsets = [0, 0], sizes = [1, 8], strides = [1, 1]} : vector<3x8xf32> to vector<1x8xf32>
    %4 = vector.extract_strided_slice %1 {offsets = [0, 0], sizes = [4, 1], strides = [1, 1]} : vector<4x3xf32> to vector<4x1xf32>
    %5 = vector.broadcast %3 : vector<1x8xf32> to vector<4x8xf32>
    %6 = vector.broadcast %4 : vector<4x1xf32> to vector<4x8xf32>
    %7 = arith.subf %5, %6 : vector<4x8xf32>
    %8 = vector.extract_strided_slice %0 {offsets = [1, 0], sizes = [1, 8], strides = [1, 1]} : vector<3x8xf32> to vector<1x8xf32>
    %9 = vector.extract_strided_slice %1 {offsets = [0, 1], sizes = [4, 1], strides = [1, 1]} : vector<4x3xf32> to vector<4x1xf32>
    %10 = vector.broadcast %8 : vector<1x8xf32> to vector<4x8xf32>
    %11 = vector.broadcast %9 : vector<4x1xf32> to vector<4x8xf32>
    %12 = arith.subf %10, %11 : vector<4x8xf32>
    %13 = vector.extract_strided_slice %0 {offsets = [2, 0], sizes = [1, 8], strides = [1, 1]} : vector<3x8xf32> to vector<1x8xf32>
    %14 = vector.extract_strided_slice %1 {offsets = [0, 2], sizes = [4, 1], strides = [1, 1]} : vector<4x3xf32> to vector<4x1xf32>
    %15 = vector.broadcast %13 : vector<1x8xf32> to vector<4x8xf32>
    %16 = vector.broadcast %14 : vector<4x1xf32> to vector<4x8xf32>
    %17 = arith.subf %15, %16 : vector<4x8xf32>
    %18 = arith.mulf %7, %7 : vector<4x8xf32>
    %19 = arith.mulf %12, %12 : vector<4x8xf32>
    %20 = arith.addf %18, %19 : vector<4x8xf32>
    %21 = arith.mulf %17, %17 : vector<4x8xf32>
    %22 = arith.addf %20, %21 : vector<4x8xf32>
    %23 = math.rsqrt %22 : vector<4x8xf32>
    %cst = arith.constant -1.000000e+01 : f32
    %24 = vector.broadcast %cst : f32 to vector<4x1xf32>
    %25 = arith.mulf %24, %2 : vector<4x1xf32>
    %26 = arith.mulf %23, %23 : vector<4x8xf32>
    %27 = arith.mulf %26, %23 : vector<4x8xf32>
    %28 = vector.broadcast %25 : vector<4x1xf32> to vector<4x8xf32>
    %29 = arith.mulf %28, %27 : vector<4x8xf32>
    %30 = arith.mulf %29, %7 : vector<4x8xf32>
    %cst_5 = arith.constant dense<0.000000e+00> : vector<8xf32>
    %31 = vector.multi_reduction <add>, %30, %cst_5 [0] : vector<4x8xf32> to vector<8xf32>
    %32 = vector.shape_cast %31 : vector<8xf32> to vector<1x8xf32>
    %c0_6 = arith.constant 0 : index
    %c0_7 = arith.constant 0 : index
    %33 = vector.load %arg4[%c0_6, %c0_7] : memref<3x8xf32, #tpu.memory_space<vmem>>, vector<1x8xf32>
    tpu.vector_store %arg4[%c0_6, %c0_7], %32 {strides = array<i32>} : memref<3x8xf32, #tpu.memory_space<vmem>>, vector<1x8xf32>,
    %34 = arith.mulf %29, %12 : vector<4x8xf32>
    %cst_8 = arith.constant dense<0.000000e+00> : vector<8xf32>
    %35 = vector.multi_reduction <add>, %34, %cst_8 [0] : vector<4x8xf32> to vector<8xf32>
    %36 = vector.shape_cast %35 : vector<8xf32> to vector<1x8xf32>
    %c1 = arith.constant 1 : index
    %c0_9 = arith.constant 0 : index
    %37 = vector.load %arg4[%c1, %c0_9] : memref<3x8xf32, #tpu.memory_space<vmem>>, vector<1x8xf32>
    tpu.vector_store %arg4[%c1, %c0_9], %36 {strides = array<i32>} : memref<3x8xf32, #tpu.memory_space<vmem>>, vector<1x8xf32>,
    %38 = arith.mulf %29, %17 : vector<4x8xf32>
    %cst_10 = arith.constant dense<0.000000e+00> : vector<8xf32>
    %39 = vector.multi_reduction <add>, %38, %cst_10 [0] : vector<4x8xf32> to vector<8xf32>
    %40 = vector.shape_cast %39 : vector<8xf32> to vector<1x8xf32>
    %c2 = arith.constant 2 : index
    %c0_11 = arith.constant 0 : index
    %41 = vector.load %arg4[%c2, %c0_11] : memref<3x8xf32, #tpu.memory_space<vmem>>, vector<1x8xf32>
    tpu.vector_store %arg4[%c2, %c0_11], %40 {strides = array<i32>} : memref<3x8xf32, #tpu.memory_space<vmem>>, vector<1x8xf32>,
    return
  }
  func.func @transform_0(%arg0: i32) -> (i32, i32) {
    %c0_i32 = arith.constant 0 : i32
    %c0_i32_0 = arith.constant 0 : i32
    %c0_i32_1 = arith.constant 0 : i32
    return %c0_i32, %c0_i32_0 : i32, i32
  }
  func.func @transform_1(%arg0: i32) -> (i32, i32) {
    %c0_i32 = arith.constant 0 : i32
    %c0_i32_0 = arith.constant 0 : i32
    %c0_i32_1 = arith.constant 0 : i32
    return %c0_i32, %c0_i32_0 : i32, i32
  }
  func.func @transform_2(%arg0: i32) -> (i32, i32) {
    %c0_i32 = arith.constant 0 : i32
    %c0_i32_0 = arith.constant 0 : i32
    %c0_i32_1 = arith.constant 0 : i32
    return %c0_i32, %c0_i32_0 : i32, i32
  }
  func.func @transform_3(%arg0: i32) -> (i32, i32) {
    %c0_i32 = arith.constant 0 : i32
    %c0_i32_0 = arith.constant 0 : i32
    %c0_i32_1 = arith.constant 0 : i32
    return %c0_i32, %c0_i32_0 : i32, i32
  }
}

</mosaic_0001>

<llo_original>
// kernel: tpu_custom_call.1
$region0: #{tpu_custom_call.1}
  #allocation0 [shape = 'u32[]', space=smem, size = 0x4, offset = 0x4, fixed_abs, tag = 'smem constant byte address 0x4 - core index']
  #allocation1 [shape = 'u32[72,128]{1,0:T(1,128)}', space=vmem, size = 0x9000, scoped, tag = 'internal scratch']
  %s0 = inlined_call_operand.vmem [shape: f32[4,1], index: 0, kind: input, shape index: {}]
  %s1 = inlined_call_operand.vmem [shape: f32[4,3], index: 1, kind: input, shape index: {}]
  %s2 = inlined_call_operand.hbm [shape: f32[3,8], index: 2, kind: input, shape index: {}]
  %s3 = inlined_call_operand.hbm [shape: f32[3,8], index: 3, kind: output, shape index: {}]
  %s4 = sld [smem:[#allocation0]]
  $region26: #{tpu_custom_call.1} parent=0
    _
  %s6 = ssub.s32 1, %s4
  %s7 = scalar_select 0, %s6, %s4
  $region1: #{tpu_custom_call.1} parent=0
    #allocation2 [shape = 'u8[2048]{0}', space=vmem, size = 0x800, scoped, tag = 'input window, operand 2, single buffered']
    #allocation3 [shape = 's32[1]{0}', space=sflag, size = 0x4, scoped, tag = 'scoped memory for tpu_custom_call.1']
    #allocation4 [shape = 's32[1]{0}', space=sflag, size = 0x4, scoped, tag = 'scoped memory for tpu_custom_call.1']
    #allocation5 [shape = 'u8[2048]{0}', space=vmem, size = 0x800, scoped, tag = 'output window, operand 0, single buffered']
    %8 = vsyncpa [#allocation3], 0
    %9 = vsyncpa [#allocation4], 0
    // Predicated region
    $region2: #{tpu_custom_call.1} parent=1 // pred_check
      _
    $region3: #{tpu_custom_call.1} parent=1 // pred_check_branch
      %11 = sbr.rel (0) target = $region5
    $region4: #{tpu_custom_call.1} parent=1 // pred_region
      _
    $region5: #{tpu_custom_call.1} parent=1 // pred_fallthru
      _
    // Predicated region
    $region6: #{tpu_custom_call.1} parent=1 // pred_check
      _
    $region7: #{tpu_custom_call.1} parent=1 // pred_check_branch
      %13 = sbr.rel (0) target = $region9
    $region8: #{tpu_custom_call.1} parent=1 // pred_region
      _
    $region9: #{tpu_custom_call.1} parent=1 // pred_fallthru
      _
    // Predicated region
    $region10: #{tpu_custom_call.1} parent=1 // pred_check
      _
    $region11: #{tpu_custom_call.1} parent=1 // pred_check_branch
      %15 = sbr.rel (0) target = $region13
    $region12: #{tpu_custom_call.1} parent=1 // pred_region
      %17 = vsyncadd [#allocation3], 0
      %s19 = sshll.u32 %s2, 4
      %s20 = int_to_ptr.hbm [resolvable:$true] %s19
      %s21 = sshll.u32 [#allocation2], 4
      %s22 = int_to_ptr.vmem [resolvable:$true] %s21
      %24 = dma.hbm_to_vmem [thread:$0]  %s20, 64, %s22, [#allocation3]
    $region13: #{tpu_custom_call.1} parent=1 // pred_fallthru
      _
    // Predicated region
    $region14: #{tpu_custom_call.1} parent=1 // pred_check
      _
    $region15: #{tpu_custom_call.1} parent=1 // pred_check_branch
      %26 = sbr.rel (0) target = $region17
    $region16: #{tpu_custom_call.1} parent=1 // pred_region
      %28 = dma.done [#allocation3], 64
    $region17: #{tpu_custom_call.1} parent=1 // pred_fallthru
      _
    %v29 = vld [vmem:[#allocation2] sm:$0x7]
    %v30 = vld [vmem:[%s1] sm:$0xf]
    %v31 = vld [vmem:[%s0] sm:$0xf]
    %v32 = vperm.slane %v29, 0
    %34 = vset.pattern.permute.xlu0 0
    %35 = vperm.xlu0 %34, %v30
    %v36 = vpop.permute.xlu0 %35
    %v38 = vsub.f32 %v32, %v36
    %v39 = vperm.slane %v29, 1
    %40 = vset.pattern.permute.xlu0 1
    %41 = vperm.xlu0 %40, %v30
    %v42 = vpop.permute.xlu0 %41
    %v44 = vsub.f32 %v39, %v42
    %v45 = vperm.slane %v29, 2
    %46 = vset.pattern.permute.xlu0 2
    %47 = vperm.xlu0 %46, %v30
    %v48 = vpop.permute.xlu0 %47
    %v50 = vsub.f32 %v45, %v48
    %v51 = vmul.f32 %v38, %v38
    %v52 = vmul.f32 %v44, %v44
    %v53 = vadd.f32 %v51, %v52
    %v54 = vmul.f32 %v50, %v50
    %v55 = vadd.f32 %v53, %v54
    %v56 = vrsqrt.pop %v55
    %v57 = vmul.f32 %v56, %v55
    %v58 = vmul.f32 %v57, %v56
    %v59 = vmul.f32 0.5, %v58
    %v60 = vsub.f32 1.5, %v59
    %v61 = vmul.f32 %v56, %v60
    %vm62 = vweird.f32 %v55
    %vm63 = vweird.f32 %v56
    %vm64 = vmor %vm62, %vm63
    %v65 = vsel %vm64, %v56, %v61
    %v66 = vmul.f32 %v31, -10.0
    %v67 = vmul.f32 %v65, %v65
    %v68 = vmul.f32 %v67, %v65
    %70 = vset.pattern.permute.xlu0 0
    %71 = vperm.xlu0 %70, %v66
    %v72 = vpop.permute.xlu0 %71
    %v74 = vmul.f32 %v72, %v68
    %v75 = vmul.f32 %v74, %v38
    %vm76 = vcmask 60416
    %v77 = vsel %vm76, %v75, 0.0
    %v78 = vrot.slane %v77, 4
    %v79 = vadd.f32 %v77, %v78
    %v80 = vrot.slane %v79, 2
    %v81 = vadd.f32 %v79, %v80
    %v82 = vrot.slane %v81, 1
    %v83 = vadd.f32 %v81, %v82
    %vm84 = vcmask 57344
    %85 = vst.msk [vmem:[#allocation5] sm:$0x1] %vm84, %v83
    %v86 = vmul.f32 %v74, %v44
    %v87 = vsel %vm76, %v86, 0.0
    %v88 = vrot.slane %v87, 4
    %v89 = vadd.f32 %v87, %v88
    %v90 = vrot.slane %v89, 2
    %v91 = vadd.f32 %v89, %v90
    %v92 = vrot.slane %v91, 1
    %v93 = vadd.f32 %v91, %v92
    %94 = vst.msk [vmem:[#allocation5 + $0x1] sm:$0x1] %vm84, %v93
    %v95 = vmul.f32 %v74, %v50
    %v96 = vsel %vm76, %v95, 0.0
    %v97 = vrot.slane %v96, 4
    %v98 = vadd.f32 %v96, %v97
    %v99 = vrot.slane %v98, 2
    %v100 = vadd.f32 %v98, %v99
    %v101 = vrot.slane %v100, 1
    %v102 = vadd.f32 %v100, %v101
    %103 = vst.msk [vmem:[#allocation5 + $0x2] sm:$0x1] %vm84, %v102
    // Predicated region
    $region18: #{tpu_custom_call.1} parent=1 // pred_check
      _
    $region19: #{tpu_custom_call.1} parent=1 // pred_check_branch
      %105 = sbr.rel (0) target = $region21
    $region20: #{tpu_custom_call.1} parent=1 // pred_region
      %107 = vsyncadd [#allocation4], 0
      %s109 = sshll.u32 [#allocation5], 4
      %s110 = int_to_ptr.vmem [resolvable:$true] %s109
      %s111 = sshll.u32 %s3, 4
      %s112 = int_to_ptr.hbm [resolvable:$true] %s111
      %114 = dma.vmem_to_hbm [thread:$0]  %s110, 64, %s112, [#allocation4]
    $region21: #{tpu_custom_call.1} parent=1 // pred_fallthru
      _
    // Predicated region
    $region22: #{tpu_custom_call.1} parent=1 // pred_check
      _
    $region23: #{tpu_custom_call.1} parent=1 // pred_check_branch
      %116 = sbr.rel (0) target = $region25
    $region24: #{tpu_custom_call.1} parent=1 // pred_region
      %118 = dma.done [#allocation4], 64
    $region25: #{tpu_custom_call.1} parent=1 // pred_fallthru
      _
    %119 = vsyncpa [#allocation3], 1
    %120 = vsyncpa [#allocation4], 1

</llo_original>
